<compile_context>
chip_gen: v7x
topology: tpu7x:2x2x1
jax: 0.10.0
libtpu: 0.0.40
codegen_flags: <defaults>
</compile_context>

<pallas_src>
import functools

import jax
import jax.numpy as jnp
from jax.experimental import pallas as pl
from jax.experimental.pallas import tpu as pltpu

_VMEM_LIMIT_BYTES = 32 * 1024 * 1024  # safe on v5e/v6e (128 MiB) and v7x (64 MiB)


def _dice_stats_kernel(x_ref, gamma_ref, beta_ref, alpha_ref, par_ref, acc_ref, *,
                       n_total, np_rows, tile_rows, pack, emb, eps):
    """Pass 1: accumulate per-lane sum / sumsq; finalize BN + Dice params."""
    i = pl.program_id(0)
    last = pl.num_programs(0) - 1

    @pl.when(i == 0)
    def _():
        acc_ref[...] = jnp.zeros_like(acc_ref)

    x = x_ref[...].astype(jnp.float32)                 # [tile_rows, pack*emb]

    if np_rows % tile_rows != 0:
        # Static branch: only emitted when the last tile is partial.  Padded
        # rows (unspecified DMA contents) must not corrupt the statistics.
        row = i * tile_rows + jax.lax.broadcasted_iota(jnp.int32, x.shape, 0)
        x = jnp.where(row < np_rows, x, 0.0)

    acc_ref[0:1, :] += jnp.sum(x, axis=0, keepdims=True)
    acc_ref[1:2, :] += jnp.sum(x * x, axis=0, keepdims=True)

    @pl.when(i == last)
    def _():
        acc = acc_ref[...]                             # [2, pack*emb]
        # Fold the `pack` lane groups (stride `emb`).  After log2(pack)
        # roll+add steps every lane holds the per-channel total for channel
        # (lane mod emb), i.e. the totals already tiled in packed layout.
        s = emb
        while s < pack * emb:                          # static loop
            acc = acc + pltpu.roll(acc, shift=s, axis=1)
            s *= 2
        inv_n = 1.0 / n_total
        mean = acc[0:1, :] * inv_n
        var = acc[1:2, :] * inv_n - mean * mean        # biased (training-mode BN)
        var = jnp.maximum(var, 0.0)                    # guard fp cancellation
        scale = gamma_ref[...] * jax.lax.rsqrt(var + eps)
        alpha = alpha_ref[...]
        par_ref[0:1, :] = scale
        par_ref[1:2, :] = beta_ref[...] - mean * scale
        par_ref[2:3, :] = alpha
        par_ref[3:4, :] = 1.0 - alpha


def _dice_apply_kernel(x_ref, par_ref, o_ref):
    """Pass 2: p = sigmoid(x*scale + shift); out = x*(alpha + (1-alpha)*p)."""
    x = x_ref[...].astype(jnp.float32)
    scale = par_ref[0:1, :]
    shift = par_ref[1:2, :]
    alpha = par_ref[2:3, :]
    oma = par_ref[3:4, :]
    p = jax.nn.sigmoid(x * scale + shift)
    o_ref[...] = (x * (alpha + oma * p)).astype(o_ref.dtype)


def dice_pallas(x, alpha, gamma, beta, *, dim=2, eps=1e-8, max_tile_rows=1024):
    """Pallas implementation of Dice.forward.

    dim == 2: x [B, E];  dim == 3: x [B, F, E].  alpha/gamma/beta: (E,) or (E,1).
    """
    assert dim in (2, 3)
    orig_shape = x.shape
    if dim == 3:
        B, F, E = x.shape
        x2d = x.reshape(B * F, E)
    else:
        _, E = x.shape
        x2d = x
    N = x2d.shape[0]

    # Lane packing: fold `pack` consecutive rows into the 128-lane axis so that
    # small embedding sizes (e.g. 32) use all lanes and stores are unmasked.
    if E <= 128 and 128 % E == 0 and N % (128 // E) == 0:
        pack = 128 // E
    else:
        pack = 1
    PE = pack * E
    Np = N // pack
    xp = x2d.reshape(Np, PE)  # free row-major reshape

    # Row tiling of the packed slab (BlockSpec double-buffers each tile).
    tile_rows = min(Np, max_tile_rows)
    if tile_rows < Np:
        tile_rows = max(8, (tile_rows // 8) * 8)       # sublane-aligned tiles
    num_tiles = pl.cdiv(Np, tile_rows)

    f32 = jnp.float32
    alpha_p = jnp.tile(jnp.reshape(alpha, (1, E)).astype(f32), (1, pack))
    gamma_p = jnp.tile(jnp.reshape(gamma, (1, E)).astype(f32), (1, pack))
    beta_p = jnp.tile(jnp.reshape(beta, (1, E)).astype(f32), (1, pack))

    # ---- Pass 1: per-channel scale / shift / alpha / 1-alpha (one sweep) ----
    stats_kernel = functools.partial(
        _dice_stats_kernel, n_total=N, np_rows=Np, tile_rows=tile_rows,
        pack=pack, emb=E, eps=eps)
    params = pl.pallas_call(
        stats_kernel,
        out_shape=jax.ShapeDtypeStruct((4, PE), f32),
        grid=(num_tiles,),
        in_specs=[
            pl.BlockSpec((tile_rows, PE), lambda i: (i, 0)),
            pl.BlockSpec((1, PE), lambda i: (0, 0)),
            pl.BlockSpec((1, PE), lambda i: (0, 0)),
            pl.BlockSpec((1, PE), lambda i: (0, 0)),
        ],
        out_specs=pl.BlockSpec((4, PE), lambda i: (0, 0)),
        scratch_shapes=[pltpu.VMEM((2, PE), f32)],
        compiler_params=pltpu.CompilerParams(
            dimension_semantics=("arbitrary",),        # running reduction
            vmem_limit_bytes=_VMEM_LIMIT_BYTES),
    )(xp, gamma_p, beta_p, alpha_p)

    # ---- Pass 2: normalize + Dice blend, streamed over row tiles ----
    out_p = pl.pallas_call(
        _dice_apply_kernel,
        out_shape=jax.ShapeDtypeStruct((Np, PE), x.dtype),
        grid=(num_tiles,),
        in_specs=[
            pl.BlockSpec((tile_rows, PE), lambda i: (i, 0)),
            pl.BlockSpec((4, PE), lambda i: (0, 0)),
        ],
        out_specs=pl.BlockSpec((tile_rows, PE), lambda i: (i, 0)),
        compiler_params=pltpu.CompilerParams(
            dimension_semantics=("parallel",),         # independent tiles
            vmem_limit_bytes=_VMEM_LIMIT_BYTES),
    )(xp, params)

    return out_p.reshape(orig_shape)


def dice_reference(x, alpha, gamma, beta, *, dim=2, eps=1e-8):
    """Pure-JAX reference matching the PyTorch module (BN in training mode)."""
    if dim == 3:
        B, F, E = x.shape
        x2d = x.reshape(B * F, E).astype(jnp.float32)
    else:
        x2d = x.astype(jnp.float32)
        E = x2d.shape[1]
    mean = jnp.mean(x2d, axis=0, keepdims=True)
    var = jnp.mean((x2d - mean) ** 2, axis=0, keepdims=True)
    x_hat = (x2d - mean) / jnp.sqrt(var + eps)
    z = x_hat * jnp.reshape(gamma, (1, E)) + jnp.reshape(beta, (1, E))
    p = jax.nn.sigmoid(z)
    a = jnp.reshape(alpha, (1, E))
    out = a * (1.0 - p) * x2d + p * x2d
    return out.reshape(x.shape).astype(x.dtype)


if __name__ == "__main__":
    key = jax.random.PRNGKey(0)
    k1, k2, k3, k4, k5, k6 = jax.random.split(key, 6)

    emb_size = 32
    # Deterministic, non-trivial parameters (the PyTorch init would be
    # alpha=0, gamma=1, beta=0 which leaves terms unexercised).
    alpha = 0.25 * jax.random.normal(k1, (emb_size,), dtype=jnp.float32)
    gamma = 1.0 + 0.1 * jax.random.normal(k2, (emb_size,), dtype=jnp.float32)
    beta = 0.1 * jax.random.normal(k3, (emb_size,), dtype=jnp.float32)

    # dim == 2: [batch, emb_size]
    x2 = jax.random.normal(k4, (8, emb_size), dtype=jnp.float32)
    out2 = jax.block_until_ready(dice_pallas(x2, alpha, gamma, beta, dim=2))
    ref2 = dice_reference(x2, alpha, gamma, beta, dim=2)

    # dim == 3: [batch, num_features, emb_size]
    x3 = jax.random.normal(k5, (4, 8, emb_size), dtype=jnp.float32)
    out3 = jax.block_until_ready(dice_pallas(x3, alpha, gamma, beta, dim=3))
    ref3 = dice_reference(x3, alpha, gamma, beta, dim=3)

    # Larger dim == 2 case forced onto many row tiles with a partial last tile,
    # exercising the pipelined + masked stats path.
    xt = jax.random.normal(k6, (300, emb_size), dtype=jnp.float32)
    outt = jax.block_until_ready(
        dice_pallas(xt, alpha, gamma, beta, dim=2, max_tile_rows=8))
    reft = dice_reference(xt, alpha, gamma, beta, dim=2)

    assert out2.shape == x2.shape and out3.shape == x3.shape and outt.shape == xt.shape
    assert jnp.allclose(out2, ref2, atol=1e-4, rtol=1e-4), float(jnp.max(jnp.abs(out2 - ref2)))
    assert jnp.allclose(out3, ref3, atol=1e-4, rtol=1e-4), float(jnp.max(jnp.abs(out3 - ref3)))
    assert jnp.allclose(outt, reft, atol=1e-4, rtol=1e-4), float(jnp.max(jnp.abs(outt - reft)))

    print("KERNEL_OK")
</pallas_src>

<mosaic_0001>
module attributes {stable_mosaic.version = 11 : i64} {
  func.func @_dice_stats_kernel(%arg0: i32, %arg1: memref<2x128xf32, #tpu.memory_space<vmem>>, %arg2: memref<1x128xf32, #tpu.memory_space<vmem>>, %arg3: memref<1x128xf32, #tpu.memory_space<vmem>>, %arg4: memref<1x128xf32, #tpu.memory_space<vmem>>, %arg5: memref<4x128xf32, #tpu.memory_space<vmem>>, %arg6: memref<2x128xf32, #tpu.memory_space<vmem>>) attributes {dimension_semantics = [#tpu.dimension_semantics<arbitrary>], iteration_bounds = array<i64: 1>, scalar_prefetch = 0 : i64, scratch_operands = 1 : i64, tpu.core_type = #tpu.core_type<tc>, window_params = [{transform_indices = @transform_0, window_bounds = array<i64: 2, 128>}, {pipeline_mode = #tpu.pipeline_mode<synchronous>, transform_indices = @transform_1, window_bounds = array<i64: 1, 128>}, {pipeline_mode = #tpu.pipeline_mode<synchronous>, transform_indices = @transform_2, window_bounds = array<i64: 1, 128>}, {pipeline_mode = #tpu.pipeline_mode<synchronous>, transform_indices = @transform_3, window_bounds = array<i64: 1, 128>}, {pipeline_mode = #tpu.pipeline_mode<synchronous>, transform_indices = @transform_4, window_bounds = array<i64: 4, 128>}]} {
    %c0_i32 = arith.constant 0 : i32
    %0 = arith.cmpi eq, %arg0, %c0_i32 : i32
    %1 = arith.extui %0 : i1 to i32
    %c0_i32_0 = arith.constant 0 : i32
    %2 = arith.cmpi ne, %1, %c0_i32_0 : i32
    scf.if %2 {
      %cst_12 = arith.constant 0.000000e+00 : f32
      %18 = vector.broadcast %cst_12 : f32 to vector<2x128xf32>
      %c0_13 = arith.constant 0 : index
      %c0_14 = arith.constant 0 : index
      %19 = vector.load %arg6[%c0_13, %c0_14] : memref<2x128xf32, #tpu.memory_space<vmem>>, vector<2x128xf32>
      tpu.vector_store %arg6[%c0_13, %c0_14], %18 {strides = array<i32>} : memref<2x128xf32, #tpu.memory_space<vmem>>, vector<2x128xf32>,
    } else {
    }
    %c0 = arith.constant 0 : index
    %c0_1 = arith.constant 0 : index
    %3 = vector.load %arg1[%c0, %c0_1] : memref<2x128xf32, #tpu.memory_space<vmem>>, vector<2x128xf32>
    %c0_2 = arith.constant 0 : index
    %c0_3 = arith.constant 0 : index
    %4 = vector.load %arg6[%c0_2, %c0_3] : memref<2x128xf32, #tpu.memory_space<vmem>>, vector<1x128xf32>
    %cst = arith.constant dense<0.000000e+00> : vector<128xf32>
    %5 = vector.multi_reduction <add>, %3, %cst [0] : vector<2x128xf32> to vector<128xf32>
    %6 = vector.shape_cast %5 : vector<128xf32> to vector<1x128xf32>
    %7 = arith.addf %4, %6 : vector<1x128xf32>
    %c0_4 = arith.constant 0 : index
    %c0_5 = arith.constant 0 : index
    %8 = vector.load %arg6[%c0_4, %c0_5] : memref<2x128xf32, #tpu.memory_space<vmem>>, vector<1x128xf32>
    tpu.vector_store %arg6[%c0_4, %c0_5], %7 {strides = array<i32>} : memref<2x128xf32, #tpu.memory_space<vmem>>, vector<1x128xf32>,
    %c1 = arith.constant 1 : index
    %c0_6 = arith.constant 0 : index
    %9 = vector.load %arg6[%c1, %c0_6] : memref<2x128xf32, #tpu.memory_space<vmem>>, vector<1x128xf32>
    %10 = arith.mulf %3, %3 : vector<2x128xf32>
    %cst_7 = arith.constant dense<0.000000e+00> : vector<128xf32>
    %11 = vector.multi_reduction <add>, %10, %cst_7 [0] : vector<2x128xf32> to vector<128xf32>
    %12 = vector.shape_cast %11 : vector<128xf32> to vector<1x128xf32>
    %13 = arith.addf %9, %12 : vector<1x128xf32>
    %c1_8 = arith.constant 1 : index
    %c0_9 = arith.constant 0 : index
    %14 = vector.load %arg6[%c1_8, %c0_9] : memref<2x128xf32, #tpu.memory_space<vmem>>, vector<1x128xf32>
    tpu.vector_store %arg6[%c1_8, %c0_9], %13 {strides = array<i32>} : memref<2x128xf32, #tpu.memory_space<vmem>>, vector<1x128xf32>,
    %c0_i32_10 = arith.constant 0 : i32
    %15 = arith.cmpi eq, %arg0, %c0_i32_10 : i32
    %16 = arith.extui %15 : i1 to i32
    %c0_i32_11 = arith.constant 0 : i32
    %17 = arith.cmpi ne, %16, %c0_i32_11 : i32
    scf.if %17 {
      %c0_12 = arith.constant 0 : index
      %c0_13 = arith.constant 0 : index
      %18 = vector.load %arg6[%c0_12, %c0_13] : memref<2x128xf32, #tpu.memory_space<vmem>>, vector<2x128xf32>
      %c32_i32 = arith.constant 32 : i32
      %19 = tpu.dynamic_rotate %18 by %c32_i32 dim 1 : vector<2x128xf32>, i32 -> vector<2x128xf32>
      %20 = arith.addf %18, %19 : vector<2x128xf32>
      %c64_i32 = arith.constant 64 : i32
      %21 = tpu.dynamic_rotate %20 by %c64_i32 dim 1 : vector<2x128xf32>, i32 -> vector<2x128xf32>
      %22 = arith.addf %20, %21 : vector<2x128xf32>
      %23 = vector.extract_strided_slice %22 {offsets = [0, 0], sizes = [1, 128], strides = [1, 1]} : vector<2x128xf32> to vector<1x128xf32>
      %cst_14 = arith.constant 1.250000e-01 : f32
      %24 = vector.broadcast %cst_14 : f32 to vector<1x128xf32>
      %25 = arith.mulf %23, %24 : vector<1x128xf32>
      %26 = vector.extract_strided_slice %22 {offsets = [1, 0], sizes = [1, 128], strides = [1, 1]} : vector<2x128xf32> to vector<1x128xf32>
      %cst_15 = arith.constant 1.250000e-01 : f32
      %27 = vector.broadcast %cst_15 : f32 to vector<1x128xf32>
      %28 = arith.mulf %26, %27 : vector<1x128xf32>
      %29 = arith.mulf %25, %25 : vector<1x128xf32>
      %30 = arith.subf %28, %29 : vector<1x128xf32>
      %cst_16 = arith.constant 0.000000e+00 : f32
      %31 = vector.broadcast %cst_16 : f32 to vector<1x128xf32>
      %32 = arith.maximumf %30, %31 : vector<1x128xf32>
      %c0_17 = arith.constant 0 : index
      %c0_18 = arith.constant 0 : index
      %33 = vector.load %arg2[%c0_17, %c0_18] : memref<1x128xf32, #tpu.memory_space<vmem>>, vector<1x128xf32>
      %cst_19 = arith.constant 9.99999993E-9 : f32
      %34 = vector.broadcast %cst_19 : f32 to vector<1x128xf32>
      %35 = arith.addf %32, %34 : vector<1x128xf32>
      %36 = math.rsqrt %35 : vector<1x128xf32>
      %37 = arith.mulf %33, %36 : vector<1x128xf32>
      %c0_20 = arith.constant 0 : index
      %c0_21 = arith.constant 0 : index
      %38 = vector.load %arg4[%c0_20, %c0_21] : memref<1x128xf32, #tpu.memory_space<vmem>>, vector<1x128xf32>
      %c0_22 = arith.constant 0 : index
      %c0_23 = arith.constant 0 : index
      %39 = vector.load %arg5[%c0_22, %c0_23] : memref<4x128xf32, #tpu.memory_space<vmem>>, vector<1x128xf32>
      tpu.vector_store %arg5[%c0_22, %c0_23], %37 {strides = array<i32>} : memref<4x128xf32, #tpu.memory_space<vmem>>, vector<1x128xf32>,
      %c0_24 = arith.constant 0 : index
      %c0_25 = arith.constant 0 : index
      %40 = vector.load %arg3[%c0_24, %c0_25] : memref<1x128xf32, #tpu.memory_space<vmem>>, vector<1x128xf32>
      %41 = arith.mulf %25, %37 : vector<1x128xf32>
      %42 = arith.subf %40, %41 : vector<1x128xf32>
      %c1_26 = arith.constant 1 : index
      %c0_27 = arith.constant 0 : index
      %43 = vector.load %arg5[%c1_26, %c0_27] : memref<4x128xf32, #tpu.memory_space<vmem>>, vector<1x128xf32>
      tpu.vector_store %arg5[%c1_26, %c0_27], %42 {strides = array<i32>} : memref<4x128xf32, #tpu.memory_space<vmem>>, vector<1x128xf32>,
      %c2 = arith.constant 2 : index
      %c0_28 = arith.constant 0 : index
      %44 = vector.load %arg5[%c2, %c0_28] : memref<4x128xf32, #tpu.memory_space<vmem>>, vector<1x128xf32>
      tpu.vector_store %arg5[%c2, %c0_28], %38 {strides = array<i32>} : memref<4x128xf32, #tpu.memory_space<vmem>>, vector<1x128xf32>,
      %cst_29 = arith.constant 1.000000e+00 : f32
      %45 = vector.broadcast %cst_29 : f32 to vector<1x128xf32>
      %46 = arith.subf %45, %38 : vector<1x128xf32>
      %c3 = arith.constant 3 : index
      %c0_30 = arith.constant 0 : index
      %47 = vector.load %arg5[%c3, %c0_30] : memref<4x128xf32, #tpu.memory_space<vmem>>, vector<1x128xf32>
      tpu.vector_store %arg5[%c3, %c0_30], %46 {strides = array<i32>} : memref<4x128xf32, #tpu.memory_space<vmem>>, vector<1x128xf32>,
    } else {
    }
    return
  }
  func.func @transform_0(%arg0: i32) -> (i32, i32) {
    %c0_i32 = arith.constant 0 : i32
    %c0_i32_0 = arith.constant 0 : i32
    return %arg0, %c0_i32 : i32, i32
  }
  func.func @transform_1(%arg0: i32) -> (i32, i32) {
    %c0_i32 = arith.constant 0 : i32
    %c0_i32_0 = arith.constant 0 : i32
    %c0_i32_1 = arith.constant 0 : i32
    return %c0_i32, %c0_i32_0 : i32, i32
  }
  func.func @transform_2(%arg0: i32) -> (i32, i32) {
    %c0_i32 = arith.constant 0 : i32
    %c0_i32_0 = arith.constant 0 : i32
    %c0_i32_1 = arith.constant 0 : i32
    return %c0_i32, %c0_i32_0 : i32, i32
  }
  func.func @transform_3(%arg0: i32) -> (i32, i32) {
    %c0_i32 = arith.constant 0 : i32
    %c0_i32_0 = arith.constant 0 : i32
    %c0_i32_1 = arith.constant 0 : i32
    return %c0_i32, %c0_i32_0 : i32, i32
  }
  func.func @transform_4(%arg0: i32) -> (i32, i32) {
    %c0_i32 = arith.constant 0 : i32
    %c0_i32_0 = arith.constant 0 : i32
    %c0_i32_1 = arith.constant 0 : i32
    return %c0_i32, %c0_i32_0 : i32, i32
  }
}

</mosaic_0001>

<llo_original>
// kernel: tpu_custom_call.1
$region0: #{tpu_custom_call.1}
  #allocation0 [shape = 'u32[]', space=smem, size = 0x4, offset = 0x4, fixed_abs, tag = 'smem constant byte address 0x4 - core index']
  #allocation1 [shape = 'u32[144,128]{1,0:T(1,128)}', space=vmem, size = 0x12000, scoped, tag = 'internal scratch']
  #allocation2 [shape = 'f32[2,128]{1,0:T(2,128)}', space=vmem, size = 0x400, scoped, tag = 'scratch operand']
  %s0 = inlined_call_operand.hbm [shape: f32[2,128], index: 0, kind: input, shape index: {}]
  %s1 = inlined_call_operand.vmem [shape: f32[1,128], index: 1, kind: input, shape index: {}]
  %s2 = inlined_call_operand.vmem [shape: f32[1,128], index: 2, kind: input, shape index: {}]
  %s3 = inlined_call_operand.vmem [shape: f32[1,128], index: 3, kind: input, shape index: {}]
  %s4 = inlined_call_operand.hbm [shape: f32[4,128], index: 4, kind: output, shape index: {}]
  %s5 = sld [smem:[#allocation0]]
  $region38: #{tpu_custom_call.1} parent=0
    _
  %s7 = ssub.s32 1, %s5
  %s8 = scalar_select 0, %s7, %s5
  $region1: #{tpu_custom_call.1} parent=0
    #allocation3 [shape = 'u8[1024]{0}', space=vmem, size = 0x400, scoped, tag = 'input window, operand 0, single buffered']
    #allocation4 [shape = 's32[1]{0}', space=sflag, size = 0x4, scoped, tag = 'scoped memory for tpu_custom_call.1']
    #allocation5 [shape = 's32[1]{0}', space=sflag, size = 0x4, scoped, tag = 'scoped memory for tpu_custom_call.1']
    #allocation6 [shape = 'u8[2048]{0}', space=vmem, size = 0x800, scoped, tag = 'output window, operand 0, single buffered']
    %9 = vsyncpa [#allocation4], 0
    %10 = vsyncpa [#allocation5], 0
    // Predicated region
    $region2: #{tpu_custom_call.1} parent=1 // pred_check
      _
    $region3: #{tpu_custom_call.1} parent=1 // pred_check_branch
      %12 = sbr.rel (0) target = $region5
    $region4: #{tpu_custom_call.1} parent=1 // pred_region
      %s14 = ssub.s32 32, 32
      %15 = vsyncadd [#allocation4], %s14
      %s17 = sshll.u32 [#allocation3], 4
      %s18 = int_to_ptr.vmem [resolvable:$true] %s17
      %20 = dma.hbm_to_vmem [thread:$0]  %s0, 32, %s18, [#allocation4]
    $region5: #{tpu_custom_call.1} parent=1 // pred_fallthru
      _
    // Predicated region
    $region6: #{tpu_custom_call.1} parent=1 // pred_check
      _
    $region7: #{tpu_custom_call.1} parent=1 // pred_check_branch
      %22 = sbr.rel (0) target = $region9
    $region8: #{tpu_custom_call.1} parent=1 // pred_region
      _
    $region9: #{tpu_custom_call.1} parent=1 // pred_fallthru
      _
    // Predicated region
    $region10: #{tpu_custom_call.1} parent=1 // pred_check
      _
    $region11: #{tpu_custom_call.1} parent=1 // pred_check_branch
      %24 = sbr.rel (0) target = $region13
    $region12: #{tpu_custom_call.1} parent=1 // pred_region
      _
    $region13: #{tpu_custom_call.1} parent=1 // pred_fallthru
      _
    // Predicated region
    $region14: #{tpu_custom_call.1} parent=1 // pred_check
      _
    $region15: #{tpu_custom_call.1} parent=1 // pred_check_branch
      %26 = sbr.rel (0) target = $region17
    $region16: #{tpu_custom_call.1} parent=1 // pred_region
      _
    $region17: #{tpu_custom_call.1} parent=1 // pred_fallthru
      _
    // Predicated region
    $region18: #{tpu_custom_call.1} parent=1 // pred_check
      _
    $region19: #{tpu_custom_call.1} parent=1 // pred_check_branch
      %28 = sbr.rel (0) target = $region21
    $region20: #{tpu_custom_call.1} parent=1 // pred_region
      %29 = dma.done [#allocation4], 32
    $region21: #{tpu_custom_call.1} parent=1 // pred_fallthru
      _
    %p30 = scmp.eq.s32.totalorder 0, 0
    // Predicated region
    $region22: #{tpu_custom_call.1} parent=1 // pred_check
      %p31 = pneg %p30
    $region23: #{tpu_custom_call.1} parent=1 // pred_check_branch
      %33 = sbr.rel (%p31) target = $region25
    $region24: #{tpu_custom_call.1} parent=1 // pred_region
      %34 = vst [vmem:[#allocation2] sm:$0x3] 0.0
    $region25: #{tpu_custom_call.1} parent=1 // pred_fallthru
      _
    %v35 = vld [vmem:[#allocation3] sm:$0x3]
    %v36 = vld [vmem:[#allocation2] sm:$0x1]
    %vm37 = vcmask 1041408
    %v38 = vsel %vm37, %v35, 0.0
    %v39 = vrot.slane %v38, 4
    %v40 = vadd.f32 %v38, %v39
    %v41 = vrot.slane %v40, 2
    %v42 = vadd.f32 %v40, %v41
    %v43 = vrot.slane %v42, 1
    %v44 = vadd.f32 %v42, %v43
    %v45 = vadd.f32 %v36, %v44
    %46 = vst [vmem:[#allocation2] sm:$0x1] %v45
    %v47 = vld [vmem:[#allocation2 + $0x1] sm:$0x1]
    %v48 = vmul.f32 %v35, %v35
    %v49 = vsel %vm37, %v48, 0.0
    %v50 = vrot.slane %v49, 4
    %v51 = vadd.f32 %v49, %v50
    %v52 = vrot.slane %v51, 2
    %v53 = vadd.f32 %v51, %v52
    %v54 = vrot.slane %v53, 1
    %v55 = vadd.f32 %v53, %v54
    %v56 = vadd.f32 %v47, %v55
    %57 = vst [vmem:[#allocation2 + $0x1] sm:$0x1] %v56
    // Predicated region
    $region26: #{tpu_custom_call.1} parent=1 // pred_check
      %p58 = pneg %p30
    $region27: #{tpu_custom_call.1} parent=1 // pred_check_branch
      %60 = sbr.rel (%p58) target = $region29
    $region28: #{tpu_custom_call.1} parent=1 // pred_region
      %v61 = vld [vmem:[#allocation2] sm:$0x3]
      %62 = vrot.lane.b32.xlu0 %v61, 32
      %v63 = vpop.permute.xlu0 %62
      %v64 = vadd.f32 %v61, %v63
      %65 = vrot.lane.b32.xlu0 %v64, 64
      %v66 = vpop.permute.xlu0 %65
      %v67 = vadd.f32 %v64, %v66
      %v68 = vmul.f32 %v67, 0.125
      %v69 = vmul.f32 %v68, %v68
      %v71 = vrot.slane %v69, 7
      %v73 = vsub.f32 %v68, %v71
      %v74 = vmax.f32 %v73, 0.0
      %v75 = vld [vmem:[%s1] sm:$0x1]
      %v76 = vadd.f32 %v74, 1e-08
      %v77 = vrsqrt.pop %v76
      %v80 = vunpack.c.l.s4 1966171168
      %v81 = vunpack.c.0.s8 %v80
      %v82 = vlaneseq
      %v83 = vshrl.u32 %v82, 7
      %v84 = vsub.s32 %v81, %v83
      %v85 = vrot.slane %v77, %v84
      %v86 = vcombine.high %v85, %v85
      %v88 = vunpack.c.l.s4 1966171168
      %v89 = vunpack.c.0.s8 %v88
      %v90 = vlaneseq
      %v91 = vshrl.u32 %v90, 7
      %v92 = vsub.s32 %v89, %v91
      %v93 = vrot.slane %v86, %v92
      %v95 = vmul.f32 %v75, %v93
      %v96 = vld [vmem:[%s3] sm:$0x1]
      %97 = vst [vmem:[#allocation6] sm:$0x1] %v95
      %v98 = vld [vmem:[%s2] sm:$0x1]
      %v99 = vmul.f32 %v68, %v95
      %v100 = vsub.f32 %v98, %v99
      %101 = vst [vmem:[#allocation6 + $0x1] sm:$0x1] %v100
      %102 = vst [vmem:[#allocation6 + $0x2] sm:$0x1] %v96
      %v103 = vsub.f32 1.0, %v96
      %104 = vst [vmem:[#allocation6 + $0x3] sm:$0x1] %v103
    $region29: #{tpu_custom_call.1} parent=1 // pred_fallthru
      _
    // Predicated region
    $region30: #{tpu_custom_call.1} parent=1 // pred_check
      _
    $region31: #{tpu_custom_call.1} parent=1 // pred_check_branch
      %106 = sbr.rel (0) target = $region33
    $region32: #{tpu_custom_call.1} parent=1 // pred_region
      %s108 = ssub.s32 64, 64
      %109 = vsyncadd [#allocation5], %s108
      %s111 = sshll.u32 [#allocation6], 4
      %s112 = int_to_ptr.vmem [resolvable:$true] %s111
      %114 = dma.vmem_to_hbm [thread:$0]  %s112, 64, %s4, [#allocation5]
    $region33: #{tpu_custom_call.1} parent=1 // pred_fallthru
      _
    // Predicated region
    $region34: #{tpu_custom_call.1} parent=1 // pred_check
      _
    $region35: #{tpu_custom_call.1} parent=1 // pred_check_branch
      %116 = sbr.rel (0) target = $region37
    $region36: #{tpu_custom_call.1} parent=1 // pred_region
      %117 = dma.done [#allocation5], 64
    $region37: #{tpu_custom_call.1} parent=1 // pred_fallthru
      _
    %118 = vsyncpa [#allocation4], 1
    %119 = vsyncpa [#allocation5], 1

</llo_original>
